<compile_context>
chip_gen: v7x
topology: tpu7x:2x2x1
jax: 0.10.0
libtpu: 0.0.40
codegen_flags: <defaults>
</compile_context>

<pallas_src>
import math

import jax
import jax.numpy as jnp
from jax import lax
from jax.experimental import pallas as pl
from jax.experimental.pallas import tpu as pltpu

_NEG_INF = -1e30                       # finite "minus infinity" (no inf-inf NaNs)
_VMEM_LIMIT = 48 * 1024 * 1024         # > v5e/v6e scoped defaults, < v7x physical


# --------------------------------------------------------------------------
# Kernel A: N-tiled fused QKV projection  (x @ W_qkv^T + b), weight pre-
#           transposed to (E, 3E) and pre-scaled (q columns carry 1/sqrt(D)).
# --------------------------------------------------------------------------
def qkv_proj_kernel(x_ref, w_ref, b_ref, o_ref):
    # x_ref: (1, TQ, E), w_ref: (E, TN), b_ref: (1, TN), o_ref: (1, TQ, TN)
    y = jnp.dot(x_ref[0], w_ref[...], preferred_element_type=jnp.float32)
    o_ref[0] = (y + b_ref[0].astype(jnp.float32)).astype(o_ref.dtype)


# --------------------------------------------------------------------------
# Kernel B: causal flash attention (online softmax over KV tiles) fused with
#           the output projection (per-head matmuls accumulated into (TQ, E)).
# --------------------------------------------------------------------------
def attn_kernel(q_ref, k_ref, v_ref, wo_ref, bo_ref, o_ref, m_sc, l_sc, acc_sc):
    # q_ref: (1, H, TQ, D)   k_ref/v_ref: (1, H, TK, D)
    # wo_ref: (H, D, E)      bo_ref: (1, E)       o_ref: (1, TQ, E)
    # m_sc/l_sc: (H, TQ, 1) f32 scratch, acc_sc: (H, TQ, D) f32 scratch
    H, TQ, D = q_ref.shape[1], q_ref.shape[2], q_ref.shape[3]
    TK = k_ref.shape[2]
    qi = pl.program_id(1)
    kv = pl.program_id(2)

    @pl.when(kv == 0)
    def _():
        m_sc[...] = jnp.full(m_sc.shape, _NEG_INF, m_sc.dtype)
        l_sc[...] = jnp.zeros(l_sc.shape, l_sc.dtype)
        acc_sc[...] = jnp.zeros(acc_sc.shape, acc_sc.dtype)

    def online_softmax_step(masked: bool):
        q = q_ref[0]                                          # (H, TQ, D), pre-scaled
        k = k_ref[0]                                          # (H, TK, D)
        v = v_ref[0]                                          # (H, TK, D)
        s = jnp.einsum('hqd,hkd->hqk', q, k,
                       preferred_element_type=jnp.float32)    # (H, TQ, TK)
        if masked:
            # Diagonal block: q-tile and kv-tile share the same global offset
            # (TQ == TK), so the mask is purely relative.
            rows = lax.broadcasted_iota(jnp.int32, (TQ, TK), 0)
            cols = lax.broadcasted_iota(jnp.int32, (TQ, TK), 1)
            s = jnp.where((cols <= rows)[None, :, :], s, _NEG_INF)
        m_prev = m_sc[...]
        m_new = jnp.maximum(m_prev, jnp.max(s, axis=-1, keepdims=True))
        alpha = jnp.exp(m_prev - m_new)                       # (H, TQ, 1)
        p = jnp.exp(s - m_new)                                # (H, TQ, TK), unnormalised
        l_sc[...] = alpha * l_sc[...] + jnp.sum(p, axis=-1, keepdims=True)
        acc_sc[...] = alpha * acc_sc[...] + jnp.einsum(
            'hqk,hkd->hqd', p.astype(v.dtype), v,
            preferred_element_type=jnp.float32)               # (H, TQ, D)
        m_sc[...] = m_new

    # KV block fully below the causal diagonal: no mask needed.
    @pl.when(kv < qi)
    def _():
        online_softmax_step(masked=False)

    # Diagonal KV block: apply the causal mask.
    @pl.when(kv == qi)
    def _():
        online_softmax_step(masked=True)

    # Blocks with kv > qi are fully masked: no compute (and no new DMA, since
    # their index_map is clamped to the diagonal block).

    @pl.when(kv == pl.num_programs(2) - 1)
    def _():
        # Normalise after PV: one multiply on (H, TQ, D) instead of (H, TQ, S).
        attn = acc_sc[...] * pl.reciprocal(l_sc[...], approx=True)
        attn = attn.astype(wo_ref.dtype)
        # Output projection: H chained (TQ, D) x (D, E) matmuls accumulating
        # into a single (TQ, E) f32 value (head merge happens in the sum).
        y = jnp.dot(attn[0], wo_ref[0], preferred_element_type=jnp.float32)
        for h in range(1, H):
            y = y + jnp.dot(attn[h], wo_ref[h], preferred_element_type=jnp.float32)
        o_ref[0] = (y + bo_ref[0].astype(jnp.float32)).astype(o_ref.dtype)


# --------------------------------------------------------------------------
# Tiling helpers
# --------------------------------------------------------------------------
def _pick_seq_tile(S: int) -> int:
    # TQ = 128 fits all chips (incl. v7x's 64 MiB VMEM); larger tiles on
    # v5e/v6e are possible but not required for correctness.
    if S % 128 == 0 and S >= 256:
        return 128
    return S


def _pick_n_tile(N: int) -> int:
    if N <= 1024:
        return N
    for tn in (1024, 768, 512, 384, 256, 128):
        if N % tn == 0:
            return tn
    return N


# --------------------------------------------------------------------------
# Wrapper
# --------------------------------------------------------------------------
def multi_head_attention(x, w_qkv, b_qkv, w_out, b_out, *, head_number: int,
                         compute_dtype=None):
    """x: (B, S, E); w_qkv: (3E, E); b_qkv: (1, 3E); w_out: (E, E); b_out: (1, E).

    Pass compute_dtype=jnp.bfloat16 on v6e/v7x for full MXU throughput
    (accumulation stays f32); the returned dtype matches the input dtype.
    """
    out_dtype = x.dtype
    if compute_dtype is not None:
        x = x.astype(compute_dtype)
        w_qkv = w_qkv.astype(compute_dtype)
        b_qkv = b_qkv.astype(compute_dtype)
        w_out = w_out.astype(compute_dtype)
        b_out = b_out.astype(compute_dtype)

    B, S, E = x.shape
    H = head_number
    D = E // H
    TQ = _pick_seq_tile(S)
    TK = TQ                                   # causal block-skip assumes TQ == TK
    n_q = S // TQ
    n_kv = n_q
    N = 3 * E
    TN = _pick_n_tile(N)
    n_n = N // TN
    itemsize = jnp.dtype(x.dtype).itemsize

    # ---- one-time weight layout prep (HBM level, outside the kernels) ----
    scale = 1.0 / math.sqrt(D)
    w_qkv_t = jnp.transpose(w_qkv)                      # (E, 3E)
    w_qkv_t = w_qkv_t.at[:, :E].multiply(scale)         # fold 1/sqrt(D) into W_q
    b_qkv_s = b_qkv.at[:, :E].multiply(scale)           # ... and into b_q
    w_out_hde = jnp.transpose(w_out).reshape(H, D, E)   # (H, D, E)

    # ---- Kernel A: N-tiled QKV projection (weight-stationary grid order) ----
    qkv_cost = pl.CostEstimate(
        flops=2 * B * S * E * N,
        transcendentals=0,
        bytes_accessed=itemsize * (B * S * E + E * N + N + B * S * N))
    qkv = pl.pallas_call(
        qkv_proj_kernel,
        out_shape=jax.ShapeDtypeStruct((B, S, N), x.dtype),
        grid=(n_n, B, n_q),
        in_specs=[
            pl.BlockSpec((1, TQ, E), lambda n, b, q: (b, q, 0)),
            pl.BlockSpec((E, TN), lambda n, b, q: (0, n)),
            pl.BlockSpec((1, TN), lambda n, b, q: (0, n)),
        ],
        out_specs=pl.BlockSpec((1, TQ, TN), lambda n, b, q: (b, q, n)),
        compiler_params=pltpu.CompilerParams(
            dimension_semantics=("parallel", "parallel", "parallel"),
            vmem_limit_bytes=_VMEM_LIMIT),
        cost_estimate=qkv_cost,
    )(x, w_qkv_t, b_qkv_s)

    # ---- single fused head-split transpose (one HBM round trip) ----
    # (3, B, H, S, D) flattened to (3B, H, S, D); q rows [0,B), k [B,2B), v [2B,3B).
    qkv_heads = (qkv.reshape(B, S, 3, H, D)
                    .transpose(2, 0, 3, 1, 4)
                    .reshape(3 * B, H, S, D))

    # ---- Kernel B: causal flash attention + fused output projection ----
    attn_cost = pl.CostEstimate(
        flops=2 * B * H * S * S * D + 2 * B * S * E * E,   # causal ~halves QK/PV
        transcendentals=B * H * S * S // 2,
        bytes_accessed=itemsize * (3 * B * S * E + E * E + E + B * S * E))

    def q_map(b, q, kv):
        return (b, 0, q, 0)

    def k_map(b, q, kv):
        # Clamp to the diagonal block so fully-masked KV steps re-use the
        # already-resident block (no DMA) while compute is skipped in-kernel.
        return (B + b, 0, jnp.minimum(kv, q), 0)

    def v_map(b, q, kv):
        return (2 * B + b, 0, jnp.minimum(kv, q), 0)

    out = pl.pallas_call(
        attn_kernel,
        out_shape=jax.ShapeDtypeStruct((B, S, E), out_dtype),
        grid=(B, n_q, n_kv),
        in_specs=[
            pl.BlockSpec((1, H, TQ, D), q_map),
            pl.BlockSpec((1, H, TK, D), k_map),
            pl.BlockSpec((1, H, TK, D), v_map),
            # Constant-index blocks: single-buffered (no wasted second copy).
            pl.BlockSpec((H, D, E), lambda b, q, kv: (0, 0, 0),
                         pipeline_mode=pl.Buffered(1)),
            pl.BlockSpec((1, E), lambda b, q, kv: (0, 0),
                         pipeline_mode=pl.Buffered(1)),
        ],
        out_specs=pl.BlockSpec((1, TQ, E), lambda b, q, kv: (b, q, 0)),
        scratch_shapes=[
            pltpu.VMEM((H, TQ, 1), jnp.float32),   # running max
            pltpu.VMEM((H, TQ, 1), jnp.float32),   # running denominator
            pltpu.VMEM((H, TQ, D), jnp.float32),   # unnormalised attention output
        ],
        compiler_params=pltpu.CompilerParams(
            dimension_semantics=("parallel", "parallel", "arbitrary"),
            vmem_limit_bytes=_VMEM_LIMIT),
        cost_estimate=attn_cost,
    )(qkv_heads, qkv_heads, qkv_heads, w_out_hde, b_out)

    return out


# --------------------------------------------------------------------------
# Pure-JAX reference (mirrors the PyTorch forward in eval mode)
# --------------------------------------------------------------------------
def reference_mha(x, w_qkv, b_qkv, w_out, b_out, head_number):
    B, S, E = x.shape
    H = head_number
    D = E // H
    qkv = jnp.einsum('bse,fe->bsf', x, w_qkv) + b_qkv[0]
    q, k, v = qkv[..., :E], qkv[..., E:2 * E], qkv[..., 2 * E:]
    q = q.reshape(B, S, H, D).transpose(0, 2, 1, 3)
    k = k.reshape(B, S, H, D).transpose(0, 2, 1, 3)
    v = v.reshape(B, S, H, D).transpose(0, 2, 1, 3)
    scores = jnp.einsum('bhqd,bhkd->bhqk', q, k) / math.sqrt(D)
    mask = jnp.tril(jnp.ones((S, S), dtype=bool))
    scores = jnp.where(mask[None, None], scores, -jnp.inf)
    p = jax.nn.softmax(scores, axis=-1)
    attn = jnp.einsum('bhqk,bhkd->bhqd', p, v)
    attn = attn.transpose(0, 2, 1, 3).reshape(B, S, E)
    return jnp.einsum('bse,fe->bsf', attn, w_out) + b_out[0]


if __name__ == "__main__":
    # Small shapes consistent with the module's forward.
    B, S, E, H = 2, 8, 32, 4          # batch, seq, embedding_dimension, heads

    key = jax.random.PRNGKey(0)
    kx, k1, k2, k3, k4 = jax.random.split(key, 5)

    x = jax.random.normal(kx, (B, S, E), dtype=jnp.float32)

    # Deterministic parameter init (PyTorch-nn.Linear-style uniform bounds).
    bound = 1.0 / math.sqrt(E)
    w_qkv = jax.random.uniform(k1, (3 * E, E), jnp.float32, -bound, bound)
    b_qkv = jax.random.uniform(k2, (1, 3 * E), jnp.float32, -bound, bound)
    w_out = jax.random.uniform(k3, (E, E), jnp.float32, -bound, bound)
    b_out = jax.random.uniform(k4, (1, E), jnp.float32, -bound, bound)

    out = multi_head_attention(x, w_qkv, b_qkv, w_out, b_out, head_number=H)
    out = jax.block_until_ready(out)

    ref = reference_mha(x, w_qkv, b_qkv, w_out, b_out, H)
    assert out.shape == (B, S, E)
    # Tolerance accounts for the approximate (EUP) reciprocal in the softmax.
    assert jnp.allclose(out, ref, atol=2e-3, rtol=2e-3), "mismatch vs reference"

    print("KERNEL_OK")
</pallas_src>

<mosaic_0001>
module attributes {stable_mosaic.version = 11 : i64} {
  func.func @qkv_proj_kernel(%arg0: i32, %arg1: i32, %arg2: i32, %arg3: memref<1x8x32xf32, #tpu.memory_space<vmem>>, %arg4: memref<32x96xf32, #tpu.memory_space<vmem>>, %arg5: memref<1x96xf32, #tpu.memory_space<vmem>>, %arg6: memref<1x8x96xf32, #tpu.memory_space<vmem>>) attributes {dimension_semantics = [#tpu.dimension_semantics<parallel>, #tpu.dimension_semantics<parallel>, #tpu.dimension_semantics<parallel>], iteration_bounds = array<i64: 1, 2, 1>, scalar_prefetch = 0 : i64, scratch_operands = 0 : i64, tpu.core_type = #tpu.core_type<tc>, window_params = [{transform_indices = @transform_0, window_bounds = array<i64: 1, 8, 32>}, {transform_indices = @transform_1, window_bounds = array<i64: 32, 96>}, {transform_indices = @transform_2, window_bounds = array<i64: 1, 96>}, {transform_indices = @transform_3, window_bounds = array<i64: 1, 8, 96>}]} {
    %c0 = arith.constant 0 : index
    %c0_0 = arith.constant 0 : index
    %c0_1 = arith.constant 0 : index
    %0 = vector.load %arg3[%c0, %c0_0, %c0_1] : memref<1x8x32xf32, #tpu.memory_space<vmem>>, vector<1x8x32xf32>
    %1 = vector.shape_cast %0 : vector<1x8x32xf32> to vector<8x32xf32>
    %c0_2 = arith.constant 0 : index
    %c0_3 = arith.constant 0 : index
    %2 = vector.load %arg4[%c0_2, %c0_3] : memref<32x96xf32, #tpu.memory_space<vmem>>, vector<32x96xf32>
    %cst = arith.constant dense<0.000000e+00> : vector<8x96xf32>
    %3 = tpu.matmul %1, %2, %cst {dimension_numbers = #tpu.dot_dimension_numbers<[1], [0], [0], [1], [0, 0, 1, 1], [], []>} : vector<8x32xf32>, vector<32x96xf32>, vector<8x96xf32> -> vector<8x96xf32>
    %c0_4 = arith.constant 0 : index
    %c0_5 = arith.constant 0 : index
    %4 = vector.load %arg5[%c0_4, %c0_5] : memref<1x96xf32, #tpu.memory_space<vmem>>, vector<1x96xf32>
    %5 = vector.shape_cast %4 : vector<1x96xf32> to vector<96xf32>
    %6 = vector.shape_cast %5 : vector<96xf32> to vector<1x96xf32>
    %7 = vector.broadcast %6 : vector<1x96xf32> to vector<8x96xf32>
    %8 = arith.addf %3, %7 : vector<8x96xf32>
    %c0_6 = arith.constant 0 : index
    %c0_7 = arith.constant 0 : index
    %c0_8 = arith.constant 0 : index
    %9 = vector.load %arg6[%c0_6, %c0_7, %c0_8] : memref<1x8x96xf32, #tpu.memory_space<vmem>>, vector<1x8x96xf32>
    %10 = vector.shape_cast %9 : vector<1x8x96xf32> to vector<8x96xf32>
    %11 = vector.shape_cast %8 : vector<8x96xf32> to vector<1x8x96xf32>
    tpu.vector_store %arg6[%c0_6, %c0_7, %c0_8], %11 {strides = array<i32>} : memref<1x8x96xf32, #tpu.memory_space<vmem>>, vector<1x8x96xf32>,
    return
  }
  func.func @transform_0(%arg0: i32, %arg1: i32, %arg2: i32) -> (i32, i32, i32) {
    %c0_i32 = arith.constant 0 : i32
    %c0_i32_0 = arith.constant 0 : i32
    return %arg1, %arg2, %c0_i32 : i32, i32, i32
  }
  func.func @transform_1(%arg0: i32, %arg1: i32, %arg2: i32) -> (i32, i32) {
    %c0_i32 = arith.constant 0 : i32
    %c0_i32_0 = arith.constant 0 : i32
    return %c0_i32, %arg0 : i32, i32
  }
  func.func @transform_2(%arg0: i32, %arg1: i32, %arg2: i32) -> (i32, i32) {
    %c0_i32 = arith.constant 0 : i32
    %c0_i32_0 = arith.constant 0 : i32
    return %c0_i32, %arg0 : i32, i32
  }
  func.func @transform_3(%arg0: i32, %arg1: i32, %arg2: i32) -> (i32, i32, i32) {
    %c0_i32 = arith.constant 0 : i32
    return %arg1, %arg2, %arg0 : i32, i32, i32
  }
}

</mosaic_0001>

<llo_original>
// kernel: tpu_custom_call.1
$region0: #{tpu_custom_call.1}
  #allocation0 [shape = 'u32[]', space=smem, size = 0x4, offset = 0x4, fixed_abs, tag = 'smem constant byte address 0x4 - core index']
  #allocation1 [shape = 'u32[144,128]{1,0:T(1,128)}', space=vmem, size = 0x12000, scoped, tag = 'internal scratch']
  %s0 = inlined_call_operand.hbm [shape: f32[2,8,32], index: 0, kind: input, shape index: {}]
  %s1 = inlined_call_operand.hbm [shape: f32[32,96], index: 1, kind: input, shape index: {}]
  %s2 = inlined_call_operand.vmem [shape: f32[1,96], index: 2, kind: input, shape index: {}]
  %s3 = inlined_call_operand.hbm [shape: f32[2,8,96], index: 3, kind: output, shape index: {}]
  %s4 = sld [smem:[#allocation0]]
  $region53: #{tpu_custom_call.1} parent=0
    _
  %s6 = ssub.s32 1, %s4
  %s7 = scalar_select 0, %s6, %s4
  $region1: #{tpu_custom_call.1} parent=0
    #allocation2 [shape = 'u8[8192]{0}', space=vmem, size = 0x2000, scoped, tag = 'input window, operand 0']
    #allocation3 [shape = 's32[2]{0}', space=sflag, size = 0x8, scoped, tag = 'scoped memory for tpu_custom_call.1']
    #allocation4 [shape = 's32[2]{0}', space=sflag, size = 0x8, scoped, tag = 'scoped memory for tpu_custom_call.1']
    #allocation5 [shape = 'u8[16384]{0}', space=vmem, size = 0x4000, scoped, tag = 'input window, operand 1, single buffered']
    #allocation6 [shape = 's32[1]{0}', space=sflag, size = 0x4, scoped, tag = 'scoped memory for tpu_custom_call.1']
    #allocation7 [shape = 'u8[8192]{0}', space=vmem, size = 0x2000, scoped, tag = 'output window, operand 0']
    %8 = vsyncpa [#allocation3], 0
    %s9 = scalar_lea.sflag [#allocation3], 1
    %10 = vsyncpa %s9, 0
    %11 = vsyncpa [#allocation6], 0
    %12 = vsyncpa [#allocation4], 0
    %s13 = scalar_lea.sflag [#allocation4], 1
    %14 = vsyncpa %s13, 0
    loop: start=0, step=1, limit=4
    $region2: #{tpu_custom_call.1} parent=1 // loop_pre_header
      _
    $region3: #{tpu_custom_call.1} parent=1 // loop_header
      %s16 = sphi 0, %s20
      %p17 = scmp.ge.s32.totalorder %s16, 4
      %s23 = sphi 0, %s42
      %s24 = sphi 0, %s38
      %s25 = sphi 0, %s34
      %s26 = sphi 0, %s23
      %s27 = sphi 0, %s24
      %s28 = sphi 0, %s25
      %s29 = sphi 0, %s26
      %s30 = sphi 0, %s27
      %s31 = sphi 0, %s28
      %s47 = sphi 0, %s49
      %s50 = sphi 0, %s47
      %s51 = sphi 0, %s50
      %s67 = sphi 0, %s51
      %s73 = sphi 0, %s75
      %s76 = sphi 0, %s73
      %s77 = sphi 0, %s76
      %s93 = sphi 0, %s77
      %s99 = sphi 0, %s101
      %s102 = sphi 0, %s99
      %s103 = sphi 0, %s102
      %s119 = sphi 0, %s103
      %s129 = sphi 0, %s131
      %s132 = sphi 0, %s129
      %s133 = sphi 0, %s132
      %s149 = sphi 0, %s133
    $region4: #{tpu_custom_call.1} parent=1 // loop_header_branch
      %19 = sbr.rel (%p17) target = $region8
    $region5: #{tpu_custom_call.1} parent=1 // loop_body
      %s21 = ssub.s32 %s16, 1
      %s22 = ssub.s32 %s16, 2
      %s32 = sadd.s32 1, %s25
      %p33 = scmp.ge.s32.totalorder %s32, 1
      %s34 = scalar_select %p33, 0, %s32
      %s35 = sadd.s32 1, %s24
      %s36 = scalar_select %p33, %s35, %s24
      %p37 = scmp.ge.s32.totalorder %s36, 2
      %s38 = scalar_select %p37, 0, %s36
      %s39 = sadd.s32 1, %s23
      %s40 = scalar_select %p37, %s39, %s23
      %p41 = scmp.ge.s32.totalorder %s40, 1
      %s42 = scalar_select %p41, 0, %s40
      %s43 = ssub.s32 %s24, %s38
      %s44 = ssub.s32 %s25, %s34
      %s45 = sor.u32 %s43, %s44
      %p46 = scmp.eq.s32.totalorder %s45, 0
      %s48 = sadd.s32 %s47, 1
      %s49 = scalar_select %p46, %s47, %s48
      %p52 = pneg %p46
      %p53 = scmp.eq.s32.totalorder %s16, 1
      %p54 = por %p52, %p53
      %p55 = scmp.ne.s32.totalorder %s47, %s50
      %p56 = scmp.eq.s32.totalorder %s16, 0
      %p57 = por %p55, %p56
      %p58 = scmp.ne.s32.totalorder %s47, %s50
      %p59 = scmp.eq.s32.totalorder %s21, 1
      %p60 = por %p58, %p59
      %p61 = scmp.ne.s32.totalorder %s50, %s51
      %p62 = scmp.eq.s32.totalorder %s21, 0
      %p63 = por %p61, %p62
      %p64 = scmp.ne.s32.totalorder %s50, %s51
      %p65 = scmp.eq.s32.totalorder %s22, 1
      %p66 = por %p64, %p65
      %p68 = scmp.ne.s32.totalorder %s51, %s67
      %p69 = scmp.eq.s32.totalorder %s22, 0
      %p70 = por %p68, %p69
      %s71 = ssub.s32 %s23, %s42
      %p72 = scmp.eq.s32.totalorder %s71, 0
      %s74 = sadd.s32 %s73, 1
      %s75 = scalar_select %p72, %s73, %s74
      %p78 = pneg %p72
      %p79 = scmp.eq.s32.totalorder %s16, 1
      %p80 = por %p78, %p79
      %p81 = scmp.ne.s32.totalorder %s73, %s76
      %p82 = scmp.eq.s32.totalorder %s16, 0
      %p83 = por %p81, %p82
      %p84 = scmp.ne.s32.totalorder %s73, %s76
      %p85 = scmp.eq.s32.totalorder %s21, 1
      %p86 = por %p84, %p85
      %p87 = scmp.ne.s32.totalorder %s76, %s77
      %p88 = scmp.eq.s32.totalorder %s21, 0
      %p89 = por %p87, %p88
      %p90 = scmp.ne.s32.totalorder %s76, %s77
      %p91 = scmp.eq.s32.totalorder %s22, 1
      %p92 = por %p90, %p91
      %p94 = scmp.ne.s32.totalorder %s77, %s93
      %p95 = scmp.eq.s32.totalorder %s22, 0
      %p96 = por %p94, %p95
      %s97 = ssub.s32 %s23, %s42
      %p98 = scmp.eq.s32.totalorder %s97, 0
      %s100 = sadd.s32 %s99, 1
      %s101 = scalar_select %p98, %s99, %s100
      %p104 = pneg %p98
      %p105 = scmp.eq.s32.totalorder %s16, 1
      %p106 = por %p104, %p105
      %p107 = scmp.ne.s32.totalorder %s99, %s102
      %p108 = scmp.eq.s32.totalorder %s16, 0
      %p109 = por %p107, %p108
      %p110 = scmp.ne.s32.totalorder %s99, %s102
      %p111 = scmp.eq.s32.totalorder %s21, 1
      %p112 = por %p110, %p111
      %p113 = scmp.ne.s32.totalorder %s102, %s103
      %p114 = scmp.eq.s32.totalorder %s21, 0
      %p115 = por %p113, %p114
      %p116 = scmp.ne.s32.totalorder %s102, %s103
      %p117 = scmp.eq.s32.totalorder %s22, 1
      %p118 = por %p116, %p117
      %p120 = scmp.ne.s32.totalorder %s103, %s119
      %p121 = scmp.eq.s32.totalorder %s22, 0
      %p122 = por %p120, %p121
      %s123 = ssub.s32 %s24, %s38
      %s124 = ssub.s32 %s25, %s34
      %s125 = sor.u32 %s123, %s124
      %s126 = ssub.s32 %s23, %s42
      %s127 = sor.u32 %s125, %s126
      %p128 = scmp.eq.s32.totalorder %s127, 0
      %s130 = sadd.s32 %s129, 1
      %s131 = scalar_select %p128, %s129, %s130
      %p134 = pneg %p128
      %p135 = scmp.eq.s32.totalorder %s16, 1
      %p136 = por %p134, %p135
      %p137 = scmp.ne.s32.totalorder %s129, %s132
      %p138 = scmp.eq.s32.totalorder %s16, 0
      %p139 = por %p137, %p138
      %p140 = scmp.ne.s32.totalorder %s129, %s132
      %p141 = scmp.eq.s32.totalorder %s21, 1
      %p142 = por %p140, %p141
      %p143 = scmp.ne.s32.totalorder %s132, %s133
      %p144 = scmp.eq.s32.totalorder %s21, 0
      %p145 = por %p143, %p144
      %p146 = scmp.ne.s32.totalorder %s132, %s133
      %p147 = scmp.eq.s32.totalorder %s22, 1
      %p148 = por %p146, %p147
      %p150 = scmp.ne.s32.totalorder %s133, %s149
      %p151 = scmp.eq.s32.totalorder %s22, 0
      %p152 = por %p150, %p151
      %p153 = scmp.le.s32.totalorder 1, %s16
      %p154 = scmp.lt.s32.totalorder %s16, 3
      %p155 = pnand %p153, %p154
      %p156 = pneg %p155
      // Predicated region
      $region9: #{tpu_custom_call.1} parent=5 // pred_check
        _
      $region10: #{tpu_custom_call.1} parent=5 // pred_check_branch
        %158 = sbr.rel (%p155) target = $region12
      $region11: #{tpu_custom_call.1} parent=5 // pred_region
        %s159 = ssub.s32 %s16, 1
        // Predicated region
        $region13: #{tpu_custom_call.1} parent=11 // pred_check
          %p160 = pneg %p89
        $region14: #{tpu_custom_call.1} parent=11 // pred_check_branch
          %162 = sbr.rel (%p160) target = $region16
        $region15: #{tpu_custom_call.1} parent=11 // pred_region
          %s164 = ssub.s32 512, 512
          %165 = vsyncadd [#allocation6], %s164
          %s166 = smul.addr %s26, 128
          %s167 = scalar_lea.hbm %s1, %s166
          %s168 = sshll.u32 [#allocation5], 4
          %s169 = int_to_ptr.vmem [resolvable:$true] %s168
          %174 = dma.hbm_to_vmem [thread:$0]  %s167, 512, %s169, [#allocation6], 128, 128, 8
        $region16: #{tpu_custom_call.1} parent=11 // pred_fallthru
          _
        // Predicated region
        $region17: #{tpu_custom_call.1} parent=11 // pred_check
          %p175 = pneg %p115
        $region18: #{tpu_custom_call.1} parent=11 // pred_check_branch
          %177 = sbr.rel (%p175) target = $region20
        $region19: #{tpu_custom_call.1} parent=11 // pred_region
          %p178 = scmp.lt.s32.totalorder %s26, 0
          %s179 = scalar_select %p178, %s26, 0
          %s180 = scalar_lea.vmem %s2, %s179
        $region20: #{tpu_custom_call.1} parent=11 // pred_fallthru
          _
      $region12: #{tpu_custom_call.1} parent=5 // pred_fallthru
        _
      %p181 = scmp.lt.s32.totalorder %s16, 2
      // Predicated region
      $region21: #{tpu_custom_call.1} parent=5 // pred_check
        %p182 = pneg %p181
      $region22: #{tpu_custom_call.1} parent=5 // pred_check_branch
        %184 = sbr.rel (%p182) target = $region24
      $region23: #{tpu_custom_call.1} parent=5 // pred_region
        // Predicated region
        $region25: #{tpu_custom_call.1} parent=23 // pred_check
          %p185 = pneg %p57
        $region26: #{tpu_custom_call.1} parent=23 // pred_check_branch
          %187 = sbr.rel (%p185) target = $region28
        $region27: #{tpu_custom_call.1} parent=23 // pred_region
          %s188 = sand.u32 %s47, 1
          %s189 = scalar_lea.sflag [#allocation3], %s188
          %s190 = sand.u32 %s47, 1
          %s191 = smul.addr %s190, 8
          %s192 = scalar_lea.vmem [#allocation2], %s191
          %s194 = ssub.s32 128, 128
          %195 = vsyncadd %s189, %s194
          %s196 = sadd.s32 %s25, %s24
          %s197 = smul.addr %s196, 128
          %s198 = scalar_lea.hbm %s0, %s197
          %s200 = sshll.u32 %s192, 4
          %s201 = int_to_ptr.vmem [resolvable:$true] %s200
          %203 = dma.hbm_to_vmem [thread:$0]  %s198, 128, %s201, %s189
        $region28: #{tpu_custom_call.1} parent=23 // pred_fallthru
          _
      $region24: #{tpu_custom_call.1} parent=5 // pred_fallthru
        _
      %p204 = scmp.le.s32.totalorder 1, %s16
      %p205 = scmp.lt.s32.totalorder %s16, 3
      %p206 = pnand %p204, %p205
      %p207 = pneg %p206
      // Predicated region
      $region29: #{tpu_custom_call.1} parent=5 // pred_check
        _
      $region30: #{tpu_custom_call.1} parent=5 // pred_check_branch
        %209 = sbr.rel (%p206) target = $region32
      $region31: #{tpu_custom_call.1} parent=5 // pred_region
        %s210 = ssub.s32 %s16, 1
        %s211 = sand.u32 %s50, 1
        %s212 = scalar_lea.sflag [#allocation3], %s211
        %s213 = sand.u32 %s50, 1
        %s214 = smul.addr %s213, 8
        %s215 = scalar_lea.vmem [#allocation2], %s214
        // Predicated region
        $region33: #{tpu_custom_call.1} parent=31 // pred_check
          %p216 = pneg %p63
        $region34: #{tpu_custom_call.1} parent=31 // pred_check_branch
          %218 = sbr.rel (%p216) target = $region36
        $region35: #{tpu_custom_call.1} parent=31 // pred_region
          %219 = dma.done %s212, 128
        $region36: #{tpu_custom_call.1} parent=31 // pred_fallthru
          _
        // Predicated region
        $region37: #{tpu_custom_call.1} parent=31 // pred_check
          %p220 = pneg %p89
        $region38: #{tpu_custom_call.1} parent=31 // pred_check_branch
          %222 = sbr.rel (%p220) target = $region40
        $region39: #{tpu_custom_call.1} parent=31 // pred_region
          %223 = dma.done [#allocation6], 512
        $region40: #{tpu_custom_call.1} parent=31 // pred_fallthru
          _
        %s224 = sand.u32 %s50, 1
        %s225 = scalar_lea.sflag [#allocation3], %s224
        %s226 = sand.u32 %s50, 1
        %s227 = smul.addr %s226, 8
        %s228 = scalar_lea.vmem [#allocation2], %s227
        %p229 = pneg %p63
        %p230 = pneg %p60
        %p231 = pneg %p89
        %p232 = pneg %p86
        %p233 = scmp.lt.s32.totalorder %s26, 0
        %s234 = scalar_select %p233, %s26, 0
        %s235 = scalar_lea.vmem %s2, %s234
        %p236 = pneg %p115
        %p237 = pneg %p112
        %p238 = pneg %p145
        %p239 = pneg %p142
        %s240 = sand.u32 %s132, 1
        %s241 = scalar_lea.sflag [#allocation4], %s240
        %s242 = sand.u32 %s132, 1
        %s243 = smul.addr %s242, 8
        %s244 = scalar_lea.vmem [#allocation7], %s243
        %p245 = scmp.lt.s32.totalorder %s26, 0
        %s246 = scalar_select %p245, %s26, 0
        %s247 = scalar_lea.vmem %s2, %s246
        %v248 = vld [vmem:[%s215] sm:$0xff]
        %v249 = vld [vmem:[#allocation5] sm:$0xff]
        %v250 = vld [vmem:[#allocation5 + $0x8] sm:$0xff]
        %v251 = vld [vmem:[#allocation5 + $0x10] sm:$0xff]
        %v252 = vld [vmem:[#allocation5 + $0x18] sm:$0xff]
        %v253 = vld [vmem:[%s247] sm:$0x1]
        %v255 = vlaneseq
        %v256 = vshrl.u32 %v255, 7
        %v257 = vsub.s32 0, %v256
        %v258 = vrot.slane %v253, %v257
        %vm260 = vcmask 261120
        %v262 = vsel %vm260, %v248, 0
        %264 = vmatprep.subr.mxu0 0.0
        %265 = vmatpush1.msra.mxu0 %v249
        %266 = vmatprep.subr.mxu0 0.0
        %267 = vmatpush1.msra.mxu0 %v250
        %268 = vmatprep.subr.mxu0 0.0
        %269 = vmatpush1.msra.mxu0 %v251
        %270 = vmatprep.subr.mxu0 0.0
        %271 = vmatpush1.msra.mxu0 %v252
        %272 = vmatprep.subr.mxu0 0.0
        %273 = vmatpush1.msra.mxu0 0.0
        %274 = vmatprep.subr.mxu0 0.0
        %275 = vmatpush1.msra.mxu0 0.0
        %276 = vmatprep.subr.mxu0 0.0
        %277 = vmatpush1.msra.mxu0 0.0
        %278 = vmatprep.subr.mxu0 0.0
        %279 = vmatpush1.msra.mxu0 0.0
        %280 = vmatprep.subr.mxu0 0.0
        %281 = vmatpush1.msra.mxu0 0.0
        %282 = vmatprep.subr.mxu0 0.0
        %283 = vmatpush1.msra.mxu0 0.0
        %284 = vmatprep.subr.mxu0 0.0
        %285 = vmatpush1.msra.mxu0 0.0
        %286 = vmatprep.subr.mxu0 0.0
        %287 = vmatpush1.msra.mxu0 0.0
        %288 = vmatprep.subr.mxu0 0.0
        %289 = vmatpush1.msra.mxu0 0.0
        %290 = vmatprep.subr.mxu0 0.0
        %291 = vmatpush1.msra.mxu0 0.0
        %292 = vmatprep.subr.mxu0 0.0
        %293 = vmatpush1.msra.mxu0 0.0
        %294 = vmatprep.subr.mxu0 0.0
        %295 = vmatpush1.msra.mxu0 0.0
        %296 = vmatprep.subr.mxu0 0.0
        %297 = vmatpush1.msra.mxu0 0.0
        %298 = vmatprep.subr.mxu0 0.0
        %299 = vmatpush1.msra.mxu0 0.0
        %300 = vmatprep.subr.mxu0 0.0
        %301 = vmatpush1.msra.mxu0 0.0
        %302 = vmatprep.subr.mxu0 0.0
        %303 = vmatpush1.msra.mxu0 0.0
        %304 = vmatprep.subr.mxu0 0.0
        %305 = vmatpush1.msra.mxu0 0.0
        %306 = vmatprep.subr.mxu0 0.0
        %307 = vmatpush1.msra.mxu0 0.0
        %308 = vmatprep.subr.mxu0 0.0
        %309 = vmatpush1.msra.mxu0 0.0
        %310 = vmatprep.subr.mxu0 0.0
        %311 = vmatpush1.msra.mxu0 0.0
        %312 = vmatprep.subr.mxu0 0.0
        %313 = vmatpush1.msra.mxu0 0.0
        %314 = vmatprep.subr.mxu0 0.0
        %315 = vmatpush1.msra.mxu0 0.0
        %316 = vmatprep.subr.mxu0 0.0
        %317 = vmatpush1.msra.mxu0 0.0
        %318 = vmatprep.subr.mxu0 0.0
        %319 = vmatpush1.msra.mxu0 0.0
        %320 = vmatprep.subr.mxu0 0.0
        %321 = vmatpush1.msra.mxu0 0.0
        %322 = vmatprep.subr.mxu0 0.0
        %323 = vmatpush1.msra.mxu0 0.0
        %324 = vmatprep.subr.mxu0 0.0
        %325 = vmatpush1.msra.mxu0 0.0
        %326 = vmatprep.subr.mxu0 0.0
        %327 = vmatpush1.msra.mxu0 0.0
        %328 = vmatprep.mubr.f32.mxu0 0.0
        %329 = vmatmul.mubr.f32.gmra.mrb[0].mxu0 %v262
        %v330 = vpop.f32.mrb[0].mxu0
        %v331 = vadd.f32 %v258, %v330
        %v332 = vpop.f32.mrb[0].mxu0
        %333 = vdwg.mxu0
        %vm334 = vcmask 785408
        %335 = vst.msk [vmem:[%s244] sm:$0xff] %vm334, %v331
        %s336 = sand.u32 %s132, 1
        %s337 = scalar_lea.sflag [#allocation4], %s336
        %s338 = sand.u32 %s132, 1
        %s339 = smul.addr %s338, 8
        %s340 = scalar_lea.vmem [#allocation7], %s339
        // Predicated region
        $region41: #{tpu_custom_call.1} parent=31 // pred_check
          %p341 = pneg %p142
        $region42: #{tpu_custom_call.1} parent=31 // pred_check_branch
          %343 = sbr.rel (%p341) target = $region44
        $region43: #{tpu_custom_call.1} parent=31 // pred_region
          %s345 = ssub.s32 128, 128
          %346 = vsyncadd %s337, %s345
          %s347 = sadd.s32 %s26, %s28
          %s348 = sadd.s32 %s347, %s27
          %s349 = smul.addr %s348, 128
          %s350 = scalar_lea.hbm %s3, %s349
          %s352 = sshll.u32 %s340, 4
          %s353 = int_to_ptr.vmem [resolvable:$true] %s352
          %355 = dma.vmem_to_hbm [thread:$0]  %s353, 128, %s350, %s337
        $region44: #{tpu_custom_call.1} parent=31 // pred_fallthru
          _
      $region32: #{tpu_custom_call.1} parent=5 // pred_fallthru
        _
      %p356 = scmp.le.s32.totalorder 2, %s16
      // Predicated region
      $region45: #{tpu_custom_call.1} parent=5 // pred_check
        %p357 = pneg %p356
      $region46: #{tpu_custom_call.1} parent=5 // pred_check_branch
        %359 = sbr.rel (%p357) target = $region48
      $region47: #{tpu_custom_call.1} parent=5 // pred_region
        %s360 = ssub.s32 %s16, 2
        // Predicated region
        $region49: #{tpu_custom_call.1} parent=47 // pred_check
          %p361 = pneg %p148
        $region50: #{tpu_custom_call.1} parent=47 // pred_check_branch
          %363 = sbr.rel (%p361) target = $region52
        $region51: #{tpu_custom_call.1} parent=47 // pred_region
          %s364 = sand.u32 %s133, 1
          %s365 = scalar_lea.sflag [#allocation4], %s364
          %s366 = sand.u32 %s133, 1
          %s367 = smul.addr %s366, 8
          %s368 = scalar_lea.vmem [#allocation7], %s367
          %369 = dma.done %s365, 128
        $region52: #{tpu_custom_call.1} parent=47 // pred_fallthru
          _
      $region48: #{tpu_custom_call.1} parent=5 // pred_fallthru
        _
    $region6: #{tpu_custom_call.1} parent=1 // loop_footer
      %s20 = sadd.s32 1, %s16
    $region7: #{tpu_custom_call.1} parent=1 // loop_footer_branch
      %15 = sbr.rel target = $region3
    $region8: #{tpu_custom_call.1} parent=1 // loop_exit
      _
    %370 = vsyncpa [#allocation3], 1
    %s371 = scalar_lea.sflag [#allocation3], 1
    %372 = vsyncpa %s371, 1
    %373 = vsyncpa [#allocation6], 1
    %374 = vsyncpa [#allocation4], 1
    %s375 = scalar_lea.sflag [#allocation4], 1
    %376 = vsyncpa %s375, 1

</llo_original>
